<compile_context>
chip_gen: v5e
topology: v5e:2x2
jax: 0.10.0
libtpu: 0.0.40
codegen_flags: <defaults>
</compile_context>

<pallas_src>
import functools

import jax
import jax.numpy as jnp
from jax import lax
from jax.experimental import pallas as pl
from jax.experimental.pallas import tpu as pltpu


VMEM_BUDGET = 28 * 1024 * 1024        # per-call working-set budget (safe on v7x's 64 MiB)


def _round_up(x, m):
    return ((x + m - 1) // m) * m


def _vmem_limit(footprint_bytes):
    """Per-kernel scoped-VMEM limit derived from the actual tile footprint."""
    return int(min(60 * 1024 * 1024,
                   max(32 * 1024 * 1024, footprint_bytes * 3 // 2 + (4 << 20))))


# ------------------------- fused tiled linear kernel -------------------------

def _fused_linear_kernel(*args, activation, has_bias, has_ln, has_res, multi_k):
    idx = 0
    x_ref = args[idx]; idx += 1
    w_ref = args[idx]; idx += 1
    b_ref = g_ref = be_ref = r_ref = None
    if has_bias:
        b_ref = args[idx]; idx += 1
    if has_ln:
        g_ref = args[idx]; idx += 1
        be_ref = args[idx]; idx += 1
    if has_res:
        r_ref = args[idx]; idx += 1
    o_ref = args[idx]; idx += 1
    scratch = args[idx:]

    def _epilogue(y):
        if has_bias:
            y = y + b_ref[...].astype(jnp.float32)
        if activation == "gelu":
            # TODO(synk): on v5e consider approximate=True (tanh -> EUP slot) if tolerances allow.
            y = jax.nn.gelu(y, approximate=False)        # exact GELU as in HF Whisper
        if has_res:
            y = y + r_ref[...].astype(jnp.float32)       # residual fused into epilogue
        o_ref[...] = y.astype(o_ref.dtype)

    if has_ln:
        # LN fused into the prologue; computed ONCE per row block (j==0) into bf16 scratch
        # and reused across every output-column tile j (the j axis is "arbitrary").
        xln_ref = scratch[0]
        j = pl.program_id(1)

        @pl.when(j == 0)
        def _ln():
            xf = x_ref[...].astype(jnp.float32)
            mu = jnp.mean(xf, axis=-1, keepdims=True)
            var = jnp.mean(jnp.square(xf - mu), axis=-1, keepdims=True)
            xf = (xf - mu) * lax.rsqrt(var + 1e-5)
            xf = xf * g_ref[...].astype(jnp.float32) + be_ref[...].astype(jnp.float32)
            xln_ref[...] = xf.astype(xln_ref.dtype)

        y = jnp.dot(xln_ref[...], w_ref[...], preferred_element_type=jnp.float32)
        _epilogue(y)
    elif multi_k:
        acc_ref = scratch[0]
        k = pl.program_id(2)
        nk = pl.num_programs(2)

        @pl.when(k == 0)
        def _init():
            acc_ref[...] = jnp.zeros_like(acc_ref)

        acc_ref[...] += jnp.dot(x_ref[...], w_ref[...],
                                preferred_element_type=jnp.float32)

        @pl.when(k == nk - 1)
        def _ep():
            _epilogue(acc_ref[...])
    else:
        # single K step: skip the f32 accumulator VMEM roundtrip entirely.
        y = jnp.dot(x_ref[...], w_ref[...], preferred_element_type=jnp.float32)
        _epilogue(y)


def fused_linear(x, w, b=None, *, residual=None, ln_gamma=None, ln_beta=None,
                 activation=None, out_dtype=jnp.bfloat16,
                 max_tm=1024, max_tn=512, max_tk=512):
    """y = [optional LN](x) @ w [+ b] [gelu] [+ residual].

    x: [M, K] bf16, w: [K, N] bf16, b: [N] f32 or None, residual: [M, N] or None.
    M / N may be arbitrary (pl.cdiv grids, partial edge tiles); K must be reduced in one
    step when LN is fused (tk = K).
    """
    M, K = x.shape
    K2, N = w.shape
    assert K == K2
    has_bias = b is not None
    has_ln = ln_gamma is not None
    has_res = residual is not None

    # --- K tiling (contraction axis: partial tiles are NOT safe, pick a divisor) ---
    if has_ln or K <= max_tk:
        tk = K                                   # LN needs the whole feature row
    else:
        tk = (max_tk // 128) * 128
        while tk > 128 and K % tk != 0:
            tk -= 128
        if K % tk != 0:
            tk = K   # TODO(synk): pad K instead; model dims here are 128-multiples.
    multi_k = (K // tk) > 1

    # --- M / N tiling: big row block (stream the weight once), cdiv + partial edge tiles ---
    tm = M if M <= max_tm else max_tm            # max_tm multiple of 8
    tn = N if N <= max_tn else max_tn            # max_tn multiple of 128

    out_bytes = jnp.dtype(out_dtype).itemsize

    def _footprint(tm_, tn_):
        fp = 2 * (tm_ * tk * 2)                  # x bf16, double-buffered
        fp += 2 * (tk * tn_ * 2)                 # w bf16, double-buffered
        if has_bias:
            fp += 2 * (tn_ * 4)
        if has_ln:
            fp += 2 * (2 * tk * 4) + tm_ * tk * 2      # gamma/beta + LN cache scratch
        if has_res:
            fp += 2 * (tm_ * tn_ * residual.dtype.itemsize)
        fp += 2 * (tm_ * tn_ * out_bytes)
        if (not has_ln) and multi_k:
            fp += tm_ * tn_ * 4                  # f32 accumulator
        return fp

    while _footprint(tm, tn) > VMEM_BUDGET and tm > 256:
        tm = _round_up(tm // 2, 8)
    while _footprint(tm, tn) > VMEM_BUDGET and tn > 128 and tn % 128 == 0:
        tn = _round_up(tn // 2, 128)

    grid = (pl.cdiv(M, tm), pl.cdiv(N, tn), K // tk)

    in_specs = [pl.BlockSpec((tm, tk), lambda i, j, k: (i, k)),
                pl.BlockSpec((tk, tn), lambda i, j, k: (k, j))]
    operands = [x, w]
    if has_bias:
        in_specs.append(pl.BlockSpec((1, tn), lambda i, j, k: (0, j)))
        operands.append(b.reshape(1, N).astype(jnp.float32))
    if has_ln:
        in_specs.append(pl.BlockSpec((1, tk), lambda i, j, k: (0, k)))
        in_specs.append(pl.BlockSpec((1, tk), lambda i, j, k: (0, k)))
        operands.append(ln_gamma.reshape(1, K).astype(jnp.float32))
        operands.append(ln_beta.reshape(1, K).astype(jnp.float32))
    if has_res:
        in_specs.append(pl.BlockSpec((tm, tn), lambda i, j, k: (i, j)))
        operands.append(residual)

    scratch_shapes = []
    if has_ln:
        scratch_shapes.append(pltpu.VMEM((tm, tk), x.dtype))          # cached LN(x)
    elif multi_k:
        scratch_shapes.append(pltpu.VMEM((tm, tn), jnp.float32))      # accumulator

    # j must be sequential ("arbitrary") when the LN cache is keyed on j==0 (megacore-safe).
    dims = ("parallel", "arbitrary" if has_ln else "parallel", "arbitrary")

    kernel = functools.partial(_fused_linear_kernel, activation=activation,
                               has_bias=has_bias, has_ln=has_ln, has_res=has_res,
                               multi_k=multi_k)
    return pl.pallas_call(
        kernel,
        out_shape=jax.ShapeDtypeStruct((M, N), out_dtype),
        grid_spec=pltpu.PrefetchScalarGridSpec(
            num_scalar_prefetch=0,
            grid=grid,
            in_specs=in_specs,
            out_specs=pl.BlockSpec((tm, tn), lambda i, j, k: (i, j)),
            scratch_shapes=scratch_shapes),
        compiler_params=pltpu.CompilerParams(
            dimension_semantics=dims,
            vmem_limit_bytes=_vmem_limit(_footprint(tm, tn))),
    )(*operands)


# --------------------------- flash attention kernel ---------------------------

def _flash_attn_kernel(q_ref, k_ref, v_ref, o_ref, m_sc, l_sc, acc_sc, *,
                       causal, tq, tk, kv_len, num_heads, head_dim):
    qi = pl.program_id(1)
    ki = pl.program_id(2)
    nk = pl.num_programs(2)
    kv_rem = kv_len % tk                         # static: does the last kv tile straddle the end?

    @pl.when(ki == 0)
    def _init():
        m_sc[...] = jnp.full(m_sc.shape, -jnp.inf, dtype=jnp.float32)
        l_sc[...] = jnp.zeros_like(l_sc)
        acc_sc[...] = jnp.zeros_like(acc_sc)

    q_start = qi * tq
    k_start = ki * tk

    def _block(masked):
        q = q_ref[0]                             # (H, tq, Dh) bf16; 1/sqrt(Dh) baked into W_q
        kk = k_ref[0]                            # (H, tk, Dh) bf16
        s = jnp.einsum('hqd,hkd->hqk', q, kk,
                       preferred_element_type=jnp.float32)        # (H, tq, tk) f32
        if masked:
            col = k_start + lax.broadcasted_iota(jnp.int32, (num_heads, tq, tk), 2)
            ok = col < kv_len                    # kv-length mask (partial edge tile)
            if causal:
                row = q_start + lax.broadcasted_iota(jnp.int32, (num_heads, tq, tk), 1)
                ok = jnp.logical_and(ok, col <= row)
            s = jnp.where(ok, s, jnp.float32(-1e30))              # mask stays in f32
        m_prev = m_sc[...]
        m_new = jnp.maximum(m_prev, jnp.max(s, axis=-1, keepdims=True))
        alpha = jnp.exp(m_prev - m_new)
        p = jnp.exp(s - m_new)
        l_sc[...] = alpha * l_sc[...] + jnp.sum(p, axis=-1, keepdims=True)
        acc_sc[...] = alpha * acc_sc[...] + jnp.einsum(
            'hqk,hkd->hqd', p.astype(v_ref.dtype), v_ref[0],
            preferred_element_type=jnp.float32)
        m_sc[...] = m_new

    is_tail = (ki == nk - 1) if kv_rem else None

    if causal:
        run = k_start <= q_start + tq - 1                    # not strictly above diagonal
        straddle = k_start + tk - 1 > q_start
        if kv_rem:
            needs_mask = jnp.logical_or(straddle, is_tail)
        else:
            needs_mask = straddle

        @pl.when(jnp.logical_and(run, jnp.logical_not(needs_mask)))
        def _unmasked():
            _block(False)

        @pl.when(jnp.logical_and(run, needs_mask))
        def _masked():
            _block(True)
        # strictly-above-diagonal tiles: compute skipped; their DMAs are elided via the
        # clamped k/v index_map in flash_attention().
    else:
        if kv_rem:
            @pl.when(jnp.logical_not(is_tail))
            def _unmasked():
                _block(False)

            @pl.when(is_tail)
            def _masked():
                _block(True)
        else:
            _block(False)

    @pl.when(ki == nk - 1)
    def _finalize():
        inv = pl.reciprocal(l_sc[...], approx=True)              # (H, tq, 1)
        out = (acc_sc[...] * inv).astype(o_ref.dtype)            # (H, tq, Dh)
        # Assemble a lane-dense (tq, H*Dh) output block; the HBM writeback is unmasked.
        for h in range(num_heads):
            o_ref[0, :, h * head_dim:(h + 1) * head_dim] = out[h]


def flash_attention(q, k, v, causal):
    """q: [B,H,Tq,Dh], k/v: [B,H,Tk,Dh] -> [B,Tq,H*Dh] = softmax(q k^T) v (scale pre-folded)."""
    B, H, Tq, Dh = q.shape
    Tk = k.shape[2]
    D = H * Dh
    tq = Tq if Tq <= 128 else 128
    tk = Tk if Tk <= 128 else 128
    nq = pl.cdiv(Tq, tq)
    nk = pl.cdiv(Tk, tk)
    grid = (B, nq, nk)

    if causal:
        # Clamp to the last needed kv tile so above-diagonal steps re-request the same block
        # and their DMAs are elided (compute there is skipped inside the kernel).
        def kv_index(b, qi, ki):
            return (b, 0, jnp.minimum(ki, (qi * tq + tq - 1) // tk), 0)
    else:
        def kv_index(b, qi, ki):
            return (b, 0, ki, 0)

    kernel = functools.partial(_flash_attn_kernel, causal=causal, tq=tq, tk=tk,
                               kv_len=Tk, num_heads=H, head_dim=Dh)

    footprint = (2 * (H * tq * Dh * 2)            # q
                 + 2 * 2 * (H * tk * Dh * 2)      # k, v
                 + 2 * (tq * D * 2)               # out
                 + H * tq * (2 * 4 + Dh * 4))     # m, l, acc scratch

    return pl.pallas_call(
        kernel,
        out_shape=jax.ShapeDtypeStruct((B, Tq, D), q.dtype),
        grid_spec=pltpu.PrefetchScalarGridSpec(
            num_scalar_prefetch=0,
            grid=grid,
            in_specs=[pl.BlockSpec((1, H, tq, Dh), lambda b, qi, ki: (b, 0, qi, 0)),
                      pl.BlockSpec((1, H, tk, Dh), kv_index),
                      pl.BlockSpec((1, H, tk, Dh), kv_index)],
            out_specs=pl.BlockSpec((1, tq, D), lambda b, qi, ki: (b, qi, 0)),
            scratch_shapes=[pltpu.VMEM((H, tq, 1), jnp.float32),
                            pltpu.VMEM((H, tq, 1), jnp.float32),
                            pltpu.VMEM((H, tq, Dh), jnp.float32)]),
        compiler_params=pltpu.CompilerParams(
            dimension_semantics=("parallel", "parallel", "arbitrary"),
            vmem_limit_bytes=_vmem_limit(footprint)),
    )(q, k, v)


# --------------------------- Model (glue in JAX) -----------------------------

def decoder_wrapper_forward(params, decoder_input_ids, encoder_hidden_states, num_heads):
    B, T = decoder_input_ids.shape
    D = params["embed_tokens"].shape[1]
    H = num_heads
    Dh = D // H
    S = encoder_hidden_states.shape[1]

    # TODO(synk): token/position embedding gather stays in plain JAX (no dense Pallas gather op).
    h = params["embed_tokens"][decoder_input_ids] + params["embed_positions"][:T][None]
    h2 = h.reshape(B * T, D).astype(jnp.bfloat16)
    enc2 = encoder_hidden_states.reshape(B * S, D).astype(jnp.bfloat16)

    for lp in params["layers"]:
        # ---- self-attention (pre-LN fused into QKV matmul; q scale folded into W_q) ----
        qkv = fused_linear(h2, lp["sa_wqkv"], lp["sa_bqkv"],
                           ln_gamma=lp["ln1_g"], ln_beta=lp["ln1_b"])
        # TODO(synk): head-split transpose stays in XLA (activations only, tiny vs. weights).
        qkv = qkv.reshape(B, T, 3, H, Dh).transpose(2, 0, 3, 1, 4)       # (3, B, H, T, Dh)
        attn = flash_attention(qkv[0], qkv[1], qkv[2], causal=True)      # (B, T, D)
        h2 = fused_linear(attn.reshape(B * T, D), lp["sa_wo"], lp["sa_bo"], residual=h2)

        # ---- cross-attention (pre-LN fused into the Q matmul) ----
        q = fused_linear(h2, lp["ca_wq"], lp["ca_bq"],
                         ln_gamma=lp["ln2_g"], ln_beta=lp["ln2_b"])
        kv = fused_linear(enc2, lp["ca_wkv"], lp["ca_bkv"])
        q = q.reshape(B, T, H, Dh).transpose(0, 2, 1, 3)                 # (B, H, T, Dh)
        kv = kv.reshape(B, S, 2, H, Dh).transpose(2, 0, 3, 1, 4)         # (2, B, H, S, Dh)
        attn = flash_attention(q, kv[0], kv[1], causal=False)            # (B, T, D)
        h2 = fused_linear(attn.reshape(B * T, D), lp["ca_wo"], lp["ca_bo"], residual=h2)

        # ---- feed-forward (pre-LN + exact GELU fused into FC1, residual into FC2) ----
        ff = fused_linear(h2, lp["fc1_w"], lp["fc1_b"],
                          ln_gamma=lp["ln3_g"], ln_beta=lp["ln3_b"], activation="gelu")
        h2 = fused_linear(ff, lp["fc2_w"], lp["fc2_b"], residual=h2)

    # final LayerNorm fused into proj_out (Linear(D, vocab, bias=False)); f32 logits.
    # TODO(synk): bf16 logits / fused argmax in the epilogue if downstream numerics allow.
    logits = fused_linear(h2, params["proj_out_w"], None,
                          ln_gamma=params["lnf_g"], ln_beta=params["lnf_b"],
                          out_dtype=jnp.float32)
    vocab = params["vocab_size"]
    return logits.reshape(B, T, -1)[:, :, :vocab]


# ------------------------------ Param init -----------------------------------

def init_params(key, vocab, max_pos, d_model, ffn_dim, num_layers):
    """HF-like f32 parameter layout (mirrors Whisper decoder naming)."""
    ks = iter(jax.random.split(key, 8 + num_layers * 32))

    def w(shape, scale=0.02):
        return jax.random.normal(next(ks), shape, jnp.float32) * scale

    def attn_params():
        return {
            "wq": w((d_model, d_model)), "bq": jnp.zeros((d_model,), jnp.float32),
            "wk": w((d_model, d_model)),                       # k_proj has no bias (Whisper)
            "wv": w((d_model, d_model)), "bv": jnp.zeros((d_model,), jnp.float32),
            "wo": w((d_model, d_model)), "bo": jnp.zeros((d_model,), jnp.float32),
        }

    layers = []
    for _ in range(num_layers):
        layers.append({
            "self_attn": attn_params(),
            "cross_attn": attn_params(),
            "ln1_g": jnp.ones((d_model,), jnp.float32), "ln1_b": jnp.zeros((d_model,), jnp.float32),
            "ln2_g": jnp.ones((d_model,), jnp.float32), "ln2_b": jnp.zeros((d_model,), jnp.float32),
            "ln3_g": jnp.ones((d_model,), jnp.float32), "ln3_b": jnp.zeros((d_model,), jnp.float32),
            "fc1_w": w((d_model, ffn_dim)), "fc1_b": jnp.zeros((ffn_dim,), jnp.float32),
            "fc2_w": w((ffn_dim, d_model)), "fc2_b": jnp.zeros((d_model,), jnp.float32),
        })

    return {
        "embed_tokens": w((vocab, d_model)),
        "embed_positions": w((max_pos, d_model)),
        "layers": layers,
        "lnf_g": jnp.ones((d_model,), jnp.float32),
        "lnf_b": jnp.zeros((d_model,), jnp.float32),
        "proj_out_w": w((d_model, vocab)),
    }


def prepare_params(raw, num_heads):
    """Fuse QKV / KV weights, fold the 1/sqrt(Dh) scale into Q, cast matmul weights to bf16."""
    def bf(x):
        return x.astype(jnp.bfloat16)

    d_model = raw["embed_tokens"].shape[1]
    vocab = raw["proj_out_w"].shape[1]
    scale = (d_model // num_heads) ** -0.5       # exactly matches HF's q_proj(x) * scaling
    zeros_d = jnp.zeros((d_model,), jnp.float32)
    layers = []
    for lp in raw["layers"]:
        sa, ca = lp["self_attn"], lp["cross_attn"]
        layers.append({
            "sa_wqkv": bf(jnp.concatenate([sa["wq"] * scale, sa["wk"], sa["wv"]], axis=1)),
            "sa_bqkv": jnp.concatenate([sa["bq"] * scale, zeros_d, sa["bv"]]),  # k bias = 0
            "sa_wo": bf(sa["wo"]), "sa_bo": sa["bo"],
            "ca_wq": bf(ca["wq"] * scale), "ca_bq": ca["bq"] * scale,
            "ca_wkv": bf(jnp.concatenate([ca["wk"], ca["wv"]], axis=1)),
            "ca_bkv": jnp.concatenate([zeros_d, ca["bv"]]),
            "ca_wo": bf(ca["wo"]), "ca_bo": ca["bo"],
            "ln1_g": lp["ln1_g"], "ln1_b": lp["ln1_b"],
            "ln2_g": lp["ln2_g"], "ln2_b": lp["ln2_b"],
            "ln3_g": lp["ln3_g"], "ln3_b": lp["ln3_b"],
            "fc1_w": bf(lp["fc1_w"]), "fc1_b": lp["fc1_b"],
            "fc2_w": bf(lp["fc2_w"]), "fc2_b": lp["fc2_b"],
        })

    # Pad proj_out columns to a lane multiple ONCE, host-side (extra logits sliced off later).
    vocab_padded = _round_up(vocab, 128)
    proj_w = raw["proj_out_w"]
    if vocab_padded != vocab:
        proj_w = jnp.pad(proj_w, ((0, 0), (0, vocab_padded - vocab)))

    return {
        "embed_tokens": bf(raw["embed_tokens"]),
        "embed_positions": bf(raw["embed_positions"]),
        "layers": layers,
        "lnf_g": raw["lnf_g"], "lnf_b": raw["lnf_b"],
        # TODO(synk): int8 weights + per-channel scales on v5e/v6e, fp8 on v7x (epilogue dequant).
        "proj_out_w": bf(proj_w),
        "vocab_size": vocab,
    }


# --------------------------------- Main ---------------------------------------

if __name__ == "__main__":
    B, T = 2, 16           # decoder tokens
    S_ENC = 16             # encoder sequence length
    D = 128                # d_model
    H = 4                  # attention heads (Dh = 32)
    FFN = 256              # decoder_ffn_dim
    VOCAB = 256
    MAX_POS = 32
    LAYERS = 2

    key = jax.random.PRNGKey(0)
    k_param, k_ids, k_enc = jax.random.split(key, 3)

    raw_params = init_params(k_param, VOCAB, MAX_POS, D, FFN, LAYERS)
    params = prepare_params(raw_params, H)

    decoder_input_ids = jax.random.randint(k_ids, (B, T), 0, VOCAB, dtype=jnp.int32)
    encoder_hidden_states = jax.random.normal(k_enc, (B, S_ENC, D), jnp.float32)

    logits = decoder_wrapper_forward(params, decoder_input_ids, encoder_hidden_states, H)
    logits = jax.block_until_ready(logits)

    assert logits.shape == (B, T, VOCAB), logits.shape
    assert bool(jnp.all(jnp.isfinite(logits)))
    print("KERNEL_OK")
</pallas_src>

<mosaic_0001>
module attributes {stable_mosaic.version = 11 : i64} {
  func.func @_fused_linear_kernel(%arg0: i32, %arg1: i32, %arg2: i32, %arg3: memref<32x128xbf16, #tpu.memory_space<vmem>>, %arg4: memref<128x384xbf16, #tpu.memory_space<vmem>>, %arg5: memref<1x384xf32, #tpu.memory_space<vmem>>, %arg6: memref<1x128xf32, #tpu.memory_space<vmem>>, %arg7: memref<1x128xf32, #tpu.memory_space<vmem>>, %arg8: memref<32x384xbf16, #tpu.memory_space<vmem>>, %arg9: memref<32x128xbf16, #tpu.memory_space<vmem>>) attributes {dimension_semantics = [#tpu.dimension_semantics<parallel>, #tpu.dimension_semantics<arbitrary>, #tpu.dimension_semantics<arbitrary>], iteration_bounds = array<i64: 1, 1, 1>, scalar_prefetch = 0 : i64, scratch_operands = 1 : i64, tpu.core_type = #tpu.core_type<tc>, window_params = [{transform_indices = @transform_0, window_bounds = array<i64: 32, 128>}, {transform_indices = @transform_1, window_bounds = array<i64: 128, 384>}, {transform_indices = @transform_2, window_bounds = array<i64: 1, 384>}, {transform_indices = @transform_3, window_bounds = array<i64: 1, 128>}, {transform_indices = @transform_4, window_bounds = array<i64: 1, 128>}, {transform_indices = @transform_5, window_bounds = array<i64: 32, 384>}]} {
    %c0_i32 = arith.constant 0 : i32
    %0 = arith.cmpi eq, %arg1, %c0_i32 : i32
    %1 = arith.extui %0 : i1 to i32
    %c0_i32_0 = arith.constant 0 : i32
    %2 = arith.cmpi ne, %1, %c0_i32_0 : i32
    scf.if %2 {
      %c0_8 = arith.constant 0 : index
      %c0_9 = arith.constant 0 : index
      %11 = vector.load %arg3[%c0_8, %c0_9] : memref<32x128xbf16, #tpu.memory_space<vmem>>, vector<32x128xbf16>
      %12 = arith.extf %11 : vector<32x128xbf16> to vector<32x128xf32>
      %cst_10 = arith.constant dense<0.000000e+00> : vector<32xf32>
      %13 = vector.multi_reduction <add>, %12, %cst_10 [1] : vector<32x128xf32> to vector<32xf32>
      %14 = vector.shape_cast %13 : vector<32xf32> to vector<32x1xf32>
      %cst_11 = arith.constant 1.280000e+02 : f32
      %15 = vector.broadcast %cst_11 : f32 to vector<32x1xf32>
      %16 = arith.divf %14, %15 : vector<32x1xf32>
      %17 = vector.broadcast %16 : vector<32x1xf32> to vector<32x128xf32>
      %18 = arith.subf %12, %17 : vector<32x128xf32>
      %19 = arith.mulf %18, %18 : vector<32x128xf32>
      %cst_12 = arith.constant dense<0.000000e+00> : vector<32xf32>
      %20 = vector.multi_reduction <add>, %19, %cst_12 [1] : vector<32x128xf32> to vector<32xf32>
      %21 = vector.shape_cast %20 : vector<32xf32> to vector<32x1xf32>
      %cst_13 = arith.constant 1.280000e+02 : f32
      %22 = vector.broadcast %cst_13 : f32 to vector<32x1xf32>
      %23 = arith.divf %21, %22 : vector<32x1xf32>
      %24 = vector.broadcast %16 : vector<32x1xf32> to vector<32x128xf32>
      %25 = arith.subf %12, %24 : vector<32x128xf32>
      %cst_14 = arith.constant 9.99999974E-6 : f32
      %26 = vector.broadcast %cst_14 : f32 to vector<32x1xf32>
      %27 = arith.addf %23, %26 : vector<32x1xf32>
      %28 = math.rsqrt %27 : vector<32x1xf32>
      %29 = vector.broadcast %28 : vector<32x1xf32> to vector<32x128xf32>
      %30 = arith.mulf %25, %29 : vector<32x128xf32>
      %c0_15 = arith.constant 0 : index
      %c0_16 = arith.constant 0 : index
      %31 = vector.load %arg6[%c0_15, %c0_16] : memref<1x128xf32, #tpu.memory_space<vmem>>, vector<1x128xf32>
      %32 = vector.broadcast %31 : vector<1x128xf32> to vector<32x128xf32>
      %33 = arith.mulf %30, %32 : vector<32x128xf32>
      %c0_17 = arith.constant 0 : index
      %c0_18 = arith.constant 0 : index
      %34 = vector.load %arg7[%c0_17, %c0_18] : memref<1x128xf32, #tpu.memory_space<vmem>>, vector<1x128xf32>
      %35 = vector.broadcast %34 : vector<1x128xf32> to vector<32x128xf32>
      %36 = arith.addf %33, %35 : vector<32x128xf32>
      %37 = arith.truncf %36 : vector<32x128xf32> to vector<32x128xbf16>
      %c0_19 = arith.constant 0 : index
      %c0_20 = arith.constant 0 : index
      %38 = vector.load %arg9[%c0_19, %c0_20] : memref<32x128xbf16, #tpu.memory_space<vmem>>, vector<32x128xbf16>
      tpu.vector_store %arg9[%c0_19, %c0_20], %37 {strides = array<i32>} : memref<32x128xbf16, #tpu.memory_space<vmem>>, vector<32x128xbf16>,
    } else {
    }
    %c0 = arith.constant 0 : index
    %c0_1 = arith.constant 0 : index
    %3 = vector.load %arg9[%c0, %c0_1] : memref<32x128xbf16, #tpu.memory_space<vmem>>, vector<32x128xbf16>
    %c0_2 = arith.constant 0 : index
    %c0_3 = arith.constant 0 : index
    %4 = vector.load %arg4[%c0_2, %c0_3] : memref<128x384xbf16, #tpu.memory_space<vmem>>, vector<128x384xbf16>
    %cst = arith.constant dense<0.000000e+00> : vector<32x384xf32>
    %5 = tpu.matmul %3, %4, %cst {dimension_numbers = #tpu.dot_dimension_numbers<[1], [0], [0], [1], [0, 0, 1, 1], [], []>} : vector<32x128xbf16>, vector<128x384xbf16>, vector<32x384xf32> -> vector<32x384xf32>
    %c0_4 = arith.constant 0 : index
    %c0_5 = arith.constant 0 : index
    %6 = vector.load %arg5[%c0_4, %c0_5] : memref<1x384xf32, #tpu.memory_space<vmem>>, vector<1x384xf32>
    %7 = vector.broadcast %6 : vector<1x384xf32> to vector<32x384xf32>
    %8 = arith.addf %5, %7 : vector<32x384xf32>
    %9 = arith.truncf %8 : vector<32x384xf32> to vector<32x384xbf16>
    %c0_6 = arith.constant 0 : index
    %c0_7 = arith.constant 0 : index
    %10 = vector.load %arg8[%c0_6, %c0_7] : memref<32x384xbf16, #tpu.memory_space<vmem>>, vector<32x384xbf16>
    tpu.vector_store %arg8[%c0_6, %c0_7], %9 {strides = array<i32>} : memref<32x384xbf16, #tpu.memory_space<vmem>>, vector<32x384xbf16>,
    return
  }
  func.func @transform_0(%arg0: i32, %arg1: i32, %arg2: i32) -> (i32, i32) {
    %c0_i32 = arith.constant 0 : i32
    return %arg0, %arg2 : i32, i32
  }
  func.func @transform_1(%arg0: i32, %arg1: i32, %arg2: i32) -> (i32, i32) {
    %c0_i32 = arith.constant 0 : i32
    return %arg2, %arg1 : i32, i32
  }
  func.func @transform_2(%arg0: i32, %arg1: i32, %arg2: i32) -> (i32, i32) {
    %c0_i32 = arith.constant 0 : i32
    %c0_i32_0 = arith.constant 0 : i32
    return %c0_i32, %arg1 : i32, i32
  }
  func.func @transform_3(%arg0: i32, %arg1: i32, %arg2: i32) -> (i32, i32) {
    %c0_i32 = arith.constant 0 : i32
    %c0_i32_0 = arith.constant 0 : i32
    return %c0_i32, %arg2 : i32, i32
  }
  func.func @transform_4(%arg0: i32, %arg1: i32, %arg2: i32) -> (i32, i32) {
    %c0_i32 = arith.constant 0 : i32
    %c0_i32_0 = arith.constant 0 : i32
    return %c0_i32, %arg2 : i32, i32
  }
  func.func @transform_5(%arg0: i32, %arg1: i32, %arg2: i32) -> (i32, i32) {
    %c0_i32 = arith.constant 0 : i32
    return %arg0, %arg1 : i32, i32
  }
}

</mosaic_0001>

<llo_original>
// kernel: tpu_custom_call.1
$region0: #{tpu_custom_call.1}
  #allocation0 [shape = 'u32[]', space=smem, size = 0x4, offset = 0x4, fixed_abs, tag = 'smem constant byte address 0x4 - core index']
  #allocation1 [shape = 'u32[72,128]{1,0:T(1,128)}', space=vmem, size = 0x9000, scoped, tag = 'internal scratch']
  #allocation2 [shape = 'bf16[32,128]{1,0:T(8,128)(2,1)}', space=vmem, size = 0x2000, scoped, tag = 'scratch operand']
  %s0 = inlined_call_operand.hbm [shape: bf16[32,128], index: 0, kind: input, shape index: {}]
  %s1 = inlined_call_operand.hbm [shape: bf16[128,384], index: 1, kind: input, shape index: {}]
  %s2 = inlined_call_operand.hbm [shape: f32[1,384], index: 2, kind: input, shape index: {}]
  %s3 = inlined_call_operand.vmem [shape: f32[1,128], index: 3, kind: input, shape index: {}]
  %s4 = inlined_call_operand.vmem [shape: f32[1,128], index: 4, kind: input, shape index: {}]
  %s5 = inlined_call_operand.hbm [shape: bf16[32,384], index: 5, kind: output, shape index: {}]
  %s6 = sld [smem:[#allocation0]]
  $region46: #{tpu_custom_call.1} parent=0
    _
  %s8 = ssub.s32 1, %s6
  %s9 = scalar_select 0, %s8, %s6
  $region1: #{tpu_custom_call.1} parent=0
    #allocation3 [shape = 'u8[8192]{0}', space=vmem, size = 0x2000, scoped, tag = 'input window, operand 0, single buffered']
    #allocation4 [shape = 's32[1]{0}', space=sflag, size = 0x4, scoped, tag = 'scoped memory for tpu_custom_call.1']
    #allocation5 [shape = 's32[1]{0}', space=sflag, size = 0x4, scoped, tag = 'scoped memory for tpu_custom_call.1']
    #allocation6 [shape = 'u8[98304]{0}', space=vmem, size = 0x18000, scoped, tag = 'input window, operand 1, single buffered']
    #allocation7 [shape = 's32[1]{0}', space=sflag, size = 0x4, scoped, tag = 'scoped memory for tpu_custom_call.1']
    #allocation8 [shape = 'u8[1536]{0}', space=vmem, size = 0x800, scoped, tag = 'input window, operand 2, single buffered']
    #allocation9 [shape = 'u8[24576]{0}', space=vmem, size = 0x6000, scoped, tag = 'output window, operand 0, single buffered']
    %10 = vsyncpa [#allocation4], 0
    %11 = vsyncpa [#allocation7], 0
    %12 = vsyncpa [#allocation5], 0
    // Predicated region
    $region2: #{tpu_custom_call.1} parent=1 // pred_check
      _
    $region3: #{tpu_custom_call.1} parent=1 // pred_check_branch
      %14 = sbr.rel (0) target = $region5
    $region4: #{tpu_custom_call.1} parent=1 // pred_region
      %16 = vsyncadd [#allocation4], 0
      %s17 = sshll.u32 %s0, 4
      %s18 = int_to_ptr.hbm [resolvable:$true] %s17
      %s19 = sshll.u32 [#allocation3], 4
      %s20 = int_to_ptr.vmem [resolvable:$true] %s19
      %25 = dma.hbm_to_vmem [thread:$0]  %s18, 256, %s20, [#allocation4], 64, 64, 4
    $region5: #{tpu_custom_call.1} parent=1 // pred_fallthru
      _
    // Predicated region
    $region6: #{tpu_custom_call.1} parent=1 // pred_check
      _
    $region7: #{tpu_custom_call.1} parent=1 // pred_check_branch
      %27 = sbr.rel (0) target = $region9
    $region8: #{tpu_custom_call.1} parent=1 // pred_region
      %29 = vsyncadd [#allocation7], 0
      %s30 = sshll.u32 %s1, 4
      %s31 = int_to_ptr.hbm [resolvable:$true] %s30
      %s32 = sshll.u32 [#allocation6], 4
      %s33 = int_to_ptr.vmem [resolvable:$true] %s32
      %38 = dma.hbm_to_vmem [thread:$0]  %s31, 3072, %s33, [#allocation7], 192, 192, 12
    $region9: #{tpu_custom_call.1} parent=1 // pred_fallthru
      _
    // Predicated region
    $region10: #{tpu_custom_call.1} parent=1 // pred_check
      _
    $region11: #{tpu_custom_call.1} parent=1 // pred_check_branch
      %40 = sbr.rel (0) target = $region13
    $region12: #{tpu_custom_call.1} parent=1 // pred_region
      %42 = vsyncadd [#allocation7], 0
      %s44 = sshll.u32 %s2, 4
      %s45 = int_to_ptr.hbm [resolvable:$true] %s44
      %s46 = sshll.u32 [#allocation8], 4
      %s47 = int_to_ptr.vmem [resolvable:$true] %s46
      %49 = dma.hbm_to_vmem [thread:$0]  %s45, 48, %s47, [#allocation7]
    $region13: #{tpu_custom_call.1} parent=1 // pred_fallthru
      _
    // Predicated region
    $region14: #{tpu_custom_call.1} parent=1 // pred_check
      _
    $region15: #{tpu_custom_call.1} parent=1 // pred_check_branch
      %51 = sbr.rel (0) target = $region17
    $region16: #{tpu_custom_call.1} parent=1 // pred_region
      _
    $region17: #{tpu_custom_call.1} parent=1 // pred_fallthru
      _
    // Predicated region
    $region18: #{tpu_custom_call.1} parent=1 // pred_check
      _
    $region19: #{tpu_custom_call.1} parent=1 // pred_check_branch
      %53 = sbr.rel (0) target = $region21
    $region20: #{tpu_custom_call.1} parent=1 // pred_region
      _
    $region21: #{tpu_custom_call.1} parent=1 // pred_fallthru
      _
    // Predicated region
    $region22: #{tpu_custom_call.1} parent=1 // pred_check
      _
    $region23: #{tpu_custom_call.1} parent=1 // pred_check_branch
      %55 = sbr.rel (0) target = $region25
    $region24: #{tpu_custom_call.1} parent=1 // pred_region
      %57 = dma.done [#allocation4], 256
    $region25: #{tpu_custom_call.1} parent=1 // pred_fallthru
      _
    // Predicated region
    $region26: #{tpu_custom_call.1} parent=1 // pred_check
      _
    $region27: #{tpu_custom_call.1} parent=1 // pred_check_branch
      %59 = sbr.rel (0) target = $region29
    $region28: #{tpu_custom_call.1} parent=1 // pred_region
      %61 = dma.done [#allocation7], 3072
    $region29: #{tpu_custom_call.1} parent=1 // pred_fallthru
      _
    // Predicated region
    $region30: #{tpu_custom_call.1} parent=1 // pred_check
      _
    $region31: #{tpu_custom_call.1} parent=1 // pred_check_branch
      %63 = sbr.rel (0) target = $region33
    $region32: #{tpu_custom_call.1} parent=1 // pred_region
      %65 = dma.done [#allocation7], 48
    $region33: #{tpu_custom_call.1} parent=1 // pred_fallthru
      _
    %p66 = scmp.eq.s32.totalorder 0, 0
    // Predicated region
    $region34: #{tpu_custom_call.1} parent=1 // pred_check
      %p67 = pneg %p66
    $region35: #{tpu_custom_call.1} parent=1 // pred_check_branch
      %69 = sbr.rel (%p67) target = $region37
    $region36: #{tpu_custom_call.1} parent=1 // pred_region
      %v70 = vld [vmem:[#allocation3] sm:$0xf]
      %v71 = vld [vmem:[#allocation3 + $0x4] sm:$0xf]
      %v72 = vld [vmem:[#allocation3 + $0x8] sm:$0xf]
      %v73 = vld [vmem:[#allocation3 + $0xc] sm:$0xf]
      %v74 = vunpack.c.l.bf16 %v70
      %v75 = vunpack.c.l.bf16 %v71
      %v76 = vunpack.c.l.bf16 %v72
      %v77 = vunpack.c.l.bf16 %v73
      %78 = vadd.xlane.f32.xlu0 %v74
      %v79 = vpop.xlane.xlu0 %78
      %80 = vadd.xlane.f32.xlu0 %v75
      %v81 = vpop.xlane.xlu0 %80
      %82 = vadd.xlane.f32.xlu0 %v76
      %v83 = vpop.xlane.xlu0 %82
      %84 = vadd.xlane.f32.xlu0 %v77
      %v85 = vpop.xlane.xlu0 %84
      %v86 = vrcp.pop 128.0
      %v87 = vmul.f32 128.0, %v86
      %v88 = vsub.f32 1.0, %v87
      %v89 = vmul.f32 %v86, %v88
      %v90 = vadd.f32 %v86, %v89
      %vm91 = vweird.f32 %v86
      %v92 = vsel %vm91, %v86, %v90
      %v93 = vmul.f32 %v79, %v92
      %v94 = vmul.f32 %v81, %v92
      %v95 = vmul.f32 %v83, %v92
      %v96 = vmul.f32 %v85, %v92
      %v97 = vsub.f32 %v74, %v93
      %v98 = vsub.f32 %v75, %v94
      %v99 = vsub.f32 %v76, %v95
      %v100 = vsub.f32 %v77, %v96
      %v101 = vmul.f32 %v97, %v97
      %v102 = vmul.f32 %v98, %v98
      %v103 = vmul.f32 %v99, %v99
      %v104 = vmul.f32 %v100, %v100
      %105 = vadd.xlane.f32.xlu0 %v101
      %v106 = vpop.xlane.xlu0 %105
      %107 = vadd.xlane.f32.xlu0 %v102
      %v108 = vpop.xlane.xlu0 %107
      %109 = vadd.xlane.f32.xlu0 %v103
      %v110 = vpop.xlane.xlu0 %109
      %111 = vadd.xlane.f32.xlu0 %v104
      %v112 = vpop.xlane.xlu0 %111
      %v113 = vmul.f32 %v106, %v92
      %v114 = vmul.f32 %v108, %v92
      %v115 = vmul.f32 %v110, %v92
      %v116 = vmul.f32 %v112, %v92
      %v117 = vadd.f32 %v113, 1e-05
      %v118 = vadd.f32 %v114, 1e-05
      %v119 = vadd.f32 %v115, 1e-05
      %v120 = vadd.f32 %v116, 1e-05
      %v121 = vrsqrt.pop %v117
      %v122 = vmul.f32 %v121, %v117
      %v123 = vmul.f32 %v122, %v121
      %v124 = vmul.f32 0.5, %v123
      %v125 = vsub.f32 1.5, %v124
      %v126 = vmul.f32 %v121, %v125
      %vm127 = vweird.f32 %v117
      %vm128 = vweird.f32 %v121
      %vm129 = vmor %vm127, %vm128
      %v130 = vsel %vm129, %v121, %v126
      %v131 = vrsqrt.pop %v118
      %v132 = vmul.f32 %v131, %v118
      %v133 = vmul.f32 %v132, %v131
      %v134 = vmul.f32 0.5, %v133
      %v135 = vsub.f32 1.5, %v134
      %v136 = vmul.f32 %v131, %v135
      %vm137 = vweird.f32 %v118
      %vm138 = vweird.f32 %v131
      %vm139 = vmor %vm137, %vm138
      %v140 = vsel %vm139, %v131, %v136
      %v141 = vrsqrt.pop %v119
      %v142 = vmul.f32 %v141, %v119
      %v143 = vmul.f32 %v142, %v141
      %v144 = vmul.f32 0.5, %v143
      %v145 = vsub.f32 1.5, %v144
      %v146 = vmul.f32 %v141, %v145
      %vm147 = vweird.f32 %v119
      %vm148 = vweird.f32 %v141
      %vm149 = vmor %vm147, %vm148
      %v150 = vsel %vm149, %v141, %v146
      %v151 = vrsqrt.pop %v120
      %v152 = vmul.f32 %v151, %v120
      %v153 = vmul.f32 %v152, %v151
      %v154 = vmul.f32 0.5, %v153
      %v155 = vsub.f32 1.5, %v154
      %v156 = vmul.f32 %v151, %v155
      %vm157 = vweird.f32 %v120
      %vm158 = vweird.f32 %v151
      %vm159 = vmor %vm157, %vm158
      %v160 = vsel %vm159, %v151, %v156
      %v161 = vmul.f32 %v97, %v130
      %v162 = vmul.f32 %v98, %v140
      %v163 = vmul.f32 %v99, %v150
      %v164 = vmul.f32 %v100, %v160
      %v165 = vld [vmem:[%s3] sm:$0x1]
      %v167 = vperm.slane %v165, 0
      %v169 = vmul.f32 %v161, %v167
      %v170 = vmul.f32 %v162, %v167
      %v171 = vmul.f32 %v163, %v167
      %v172 = vmul.f32 %v164, %v167
      %v173 = vld [vmem:[%s4] sm:$0x1]
      %v175 = vperm.slane %v173, 0
      %v177 = vadd.f32 %v169, %v175
      %v178 = vadd.f32 %v170, %v175
      %v179 = vadd.f32 %v171, %v175
      %v180 = vadd.f32 %v172, %v175
      %v181 = vpack.c.bf16 %v177, %v177
      %v182 = vpack.c.bf16 %v178, %v178
      %v183 = vpack.c.bf16 %v179, %v179
      %v184 = vpack.c.bf16 %v180, %v180
      %185 = vst [vmem:[#allocation2] sm:$0xf] %v181
      %186 = vst [vmem:[#allocation2 + $0x4] sm:$0xf] %v182
      %187 = vst [vmem:[#allocation2 + $0x8] sm:$0xf] %v183
      %188 = vst [vmem:[#allocation2 + $0xc] sm:$0xf] %v184
    $region37: #{tpu_custom_call.1} parent=1 // pred_fallthru
      _
    %v189 = vld [vmem:[#allocation2] sm:$0xf]
    %v190 = vld [vmem:[#allocation2 + $0x4] sm:$0xf]
    %v191 = vld [vmem:[#allocation2 + $0x8] sm:$0xf]
    %v192 = vld [vmem:[#allocation2 + $0xc] sm:$0xf]
    %v193 = vld [vmem:[#allocation6] sm:$0xff]
    %v194 = vld [vmem:[#allocation6 + $0x8] sm:$0xf]
    %v195 = vld [vmem:[#allocation6 + $0xc] sm:$0xff]
    %v196 = vld [vmem:[#allocation6 + $0x14] sm:$0xf]
    %v197 = vld [vmem:[#allocation6 + $0x18] sm:$0xff]
    %v198 = vld [vmem:[#allocation6 + $0x20] sm:$0xf]
    %v199 = vld [vmem:[#allocation6 + $0x24] sm:$0xff]
    %v200 = vld [vmem:[#allocation6 + $0x2c] sm:$0xf]
    %v201 = vld [vmem:[#allocation6 + $0x30] sm:$0xff]
    %v202 = vld [vmem:[#allocation6 + $0x38] sm:$0xf]
    %v203 = vld [vmem:[#allocation6 + $0x3c] sm:$0xff]
    %v204 = vld [vmem:[#allocation6 + $0x44] sm:$0xf]
    %v205 = vld [vmem:[#allocation6 + $0x48] sm:$0xff]
    %v206 = vld [vmem:[#allocation6 + $0x50] sm:$0xf]
    %v207 = vld [vmem:[#allocation6 + $0x54] sm:$0xff]
    %v208 = vld [vmem:[#allocation6 + $0x5c] sm:$0xf]
    %v209 = vld [vmem:[#allocation6 + $0x60] sm:$0xff]
    %v210 = vld [vmem:[#allocation6 + $0x68] sm:$0xf]
    %v211 = vld [vmem:[#allocation6 + $0x6c] sm:$0xff]
    %v212 = vld [vmem:[#allocation6 + $0x74] sm:$0xf]
    %v213 = vld [vmem:[#allocation6 + $0x78] sm:$0xff]
    %v214 = vld [vmem:[#allocation6 + $0x80] sm:$0xf]
    %v215 = vld [vmem:[#allocation6 + $0x84] sm:$0xff]
    %v216 = vld [vmem:[#allocation6 + $0x8c] sm:$0xf]
    %v217 = vld [vmem:[#allocation6 + $0x90] sm:$0xff]
    %v218 = vld [vmem:[#allocation6 + $0x98] sm:$0xf]
    %v219 = vld [vmem:[#allocation6 + $0x9c] sm:$0xff]
    %v220 = vld [vmem:[#allocation6 + $0xa4] sm:$0xf]
    %v221 = vld [vmem:[#allocation6 + $0xa8] sm:$0xff]
    %v222 = vld [vmem:[#allocation6 + $0xb0] sm:$0xf]
    %v223 = vld [vmem:[#allocation6 + $0xb4] sm:$0xff]
    %v224 = vld [vmem:[#allocation6 + $0xbc] sm:$0xf]
    %v225 = vld [vmem:[#allocation8] sm:$0x7]
    %v227 = vperm.slane %v225, 0
    %v228 = vperm.slane %v225, 1
    %v229 = vperm.slane %v225, 2
    %v237 = vunpack.c.l.b16 %v189
    %v238 = vunpack.c.l.b16 %v190
    %v239 = vunpack.c.l.b16 %v191
    %v240 = vunpack.c.l.b16 %v192
    %v241 = vpack.c.b16 %v238, %v237
    %v242 = vpack.c.b16 %v240, %v239
    %v277 = vunpack.c.l.b16 %v193
    %v278 = vunpack.c.h.b16 %v193
    %v279 = vunpack.c.l.b16 %v194
    %v280 = vunpack.c.l.b16 %v195
    %v281 = vunpack.c.h.b16 %v195
    %v282 = vunpack.c.l.b16 %v196
    %v283 = vunpack.c.l.b16 %v197
    %v284 = vunpack.c.h.b16 %v197
    %v285 = vunpack.c.l.b16 %v198
    %v286 = vunpack.c.l.b16 %v199
    %v287 = vunpack.c.h.b16 %v199
    %v288 = vunpack.c.l.b16 %v200
    %v289 = vunpack.c.l.b16 %v201
    %v290 = vunpack.c.h.b16 %v201
    %v291 = vunpack.c.l.b16 %v202
    %v292 = vunpack.c.l.b16 %v203
    %v293 = vunpack.c.h.b16 %v203
    %v294 = vunpack.c.l.b16 %v204
    %v295 = vunpack.c.l.b16 %v205
    %v296 = vunpack.c.h.b16 %v205
    %v297 = vunpack.c.l.b16 %v206
    %v298 = vunpack.c.l.b16 %v207
    %v299 = vunpack.c.h.b16 %v207
    %v300 = vunpack.c.l.b16 %v208
    %v301 = vunpack.c.l.b16 %v209
    %v302 = vunpack.c.h.b16 %v209
    %v303 = vunpack.c.l.b16 %v210
    %v304 = vunpack.c.l.b16 %v211
    %v305 = vunpack.c.h.b16 %v211
    %v306 = vunpack.c.l.b16 %v212
    %v307 = vunpack.c.l.b16 %v213
    %v308 = vunpack.c.h.b16 %v213
    %v309 = vunpack.c.l.b16 %v214
    %v310 = vunpack.c.l.b16 %v215
    %v311 = vunpack.c.h.b16 %v215
    %v312 = vunpack.c.l.b16 %v216
    %v313 = vunpack.c.l.b16 %v217
    %v314 = vunpack.c.h.b16 %v217
    %v315 = vunpack.c.l.b16 %v218
    %v316 = vunpack.c.l.b16 %v219
    %v317 = vunpack.c.h.b16 %v219
    %v318 = vunpack.c.l.b16 %v220
    %v319 = vunpack.c.l.b16 %v221
    %v320 = vunpack.c.h.b16 %v221
    %v321 = vunpack.c.l.b16 %v222
    %v322 = vunpack.c.l.b16 %v223
    %v323 = vunpack.c.h.b16 %v223
    %v324 = vunpack.c.l.b16 %v224
    %v325 = vpack.c.b16 %v280, %v277
    %v326 = vpack.c.b16 %v281, %v278
    %v327 = vpack.c.b16 %v282, %v279
    %v328 = vpack.c.b16 %v286, %v283
    %v329 = vpack.c.b16 %v287, %v284
    %v330 = vpack.c.b16 %v288, %v285
    %v331 = vpack.c.b16 %v292, %v289
    %v332 = vpack.c.b16 %v293, %v290
    %v333 = vpack.c.b16 %v294, %v291
    %v334 = vpack.c.b16 %v298, %v295
    %v335 = vpack.c.b16 %v299, %v296
    %v336 = vpack.c.b16 %v300, %v297
    %v337 = vpack.c.b16 %v304, %v301
    %v338 = vpack.c.b16 %v305, %v302
    %v339 = vpack.c.b16 %v306, %v303
    %v340 = vpack.c.b16 %v310, %v307
    %v341 = vpack.c.b16 %v311, %v308
    %v342 = vpack.c.b16 %v312, %v309
    %v343 = vpack.c.b16 %v316, %v313
    %v344 = vpack.c.b16 %v317, %v314
    %v345 = vpack.c.b16 %v318, %v315
    %v346 = vpack.c.b16 %v322, %v319
    %v347 = vpack.c.b16 %v323, %v320
    %v348 = vpack.c.b16 %v324, %v321
    %373 = vmatpush.bf16.msra.mxu0 %v346
    %374 = vmatpush.bf16.msra.mxu0 %v343
    %375 = vmatpush.bf16.msra.mxu0 %v340
    %376 = vmatpush.bf16.msra.mxu0 %v337
    %377 = vmatpush.bf16.msra.mxu0 %v334
    %378 = vmatpush.bf16.msra.mxu0 %v331
    %379 = vmatpush.bf16.msra.mxu0 %v328
    %380 = vmatpush.bf16.msra.mxu0 %v325
    %381 = vmatmul.bf16.gmra.mxu0 %v241
    %v382 = vpop.f32.mrf.mxu0
    %v383 = vadd.f32 %v227, %v382
    %v384 = vpop.f32.mrf.mxu0
    %v385 = vadd.f32 %v227, %v384
    %386 = vmatmul.bf16.gmra.mxu0 %v242
    %v387 = vpop.f32.mrf.mxu0
    %v388 = vadd.f32 %v227, %v387
    %v389 = vpop.f32.mrf.mxu0
    %v390 = vadd.f32 %v227, %v389
    %391 = vdwg.mxu0
    %392 = vmatpush.bf16.msra.mxu0 %v347
    %393 = vmatpush.bf16.msra.mxu0 %v344
    %394 = vmatpush.bf16.msra.mxu0 %v341
    %395 = vmatpush.bf16.msra.mxu0 %v338
    %396 = vmatpush.bf16.msra.mxu0 %v335
    %397 = vmatpush.bf16.msra.mxu0 %v332
    %398 = vmatpush.bf16.msra.mxu0 %v329
    %399 = vmatpush.bf16.msra.mxu0 %v326
    %400 = vmatmul.bf16.gmra.mxu0 %v241
    %v401 = vpop.f32.mrf.mxu0
    %v402 = vadd.f32 %v228, %v401
    %v403 = vpop.f32.mrf.mxu0
    %v404 = vadd.f32 %v228, %v403
    %405 = vmatmul.bf16.gmra.mxu0 %v242
    %v406 = vpop.f32.mrf.mxu0
    %v407 = vadd.f32 %v228, %v406
    %v408 = vpop.f32.mrf.mxu0
    %v409 = vadd.f32 %v228, %v408
    %410 = vdwg.mxu0
    %411 = vmatpush.bf16.msra.mxu0 %v348
    %412 = vmatpush.bf16.msra.mxu0 %v345
    %413 = vmatpush.bf16.msra.mxu0 %v342
    %414 = vmatpush.bf16.msra.mxu0 %v339
    %415 = vmatpush.bf16.msra.mxu0 %v336
    %416 = vmatpush.bf16.msra.mxu0 %v333
    %417 = vmatpush.bf16.msra.mxu0 %v330
    %418 = vmatpush.bf16.msra.mxu0 %v327
    %419 = vmatmul.bf16.gmra.mxu0 %v241
    %v420 = vpop.f32.mrf.mxu0
    %v421 = vadd.f32 %v229, %v420
    %v422 = vpop.f32.mrf.mxu0
    %v423 = vadd.f32 %v229, %v422
    %424 = vmatmul.bf16.gmra.mxu0 %v242
    %v425 = vpop.f32.mrf.mxu0
    %v426 = vadd.f32 %v229, %v425
    %v427 = vpop.f32.mrf.mxu0
    %v428 = vadd.f32 %v229, %v427
    %429 = vdwg.mxu0
    %v430 = vpack.c.bf16 %v402, %v383
    %v431 = vpack.c.bf16 %v421, %v421
    %v432 = vpack.c.bf16 %v404, %v385
    %v433 = vpack.c.bf16 %v423, %v423
    %v434 = vpack.c.bf16 %v407, %v388
    %v435 = vpack.c.bf16 %v426, %v426
    %v436 = vpack.c.bf16 %v409, %v390
    %v437 = vpack.c.bf16 %v428, %v428
    %438 = vst [vmem:[#allocation9] sm:$0xff] %v430
    %439 = vst [vmem:[#allocation9 + $0x8] sm:$0xf] %v431
    %440 = vst [vmem:[#allocation9 + $0xc] sm:$0xff] %v432
    %441 = vst [vmem:[#allocation9 + $0x14] sm:$0xf] %v433
    %442 = vst [vmem:[#allocation9 + $0x18] sm:$0xff] %v434
    %443 = vst [vmem:[#allocation9 + $0x20] sm:$0xf] %v435
    %444 = vst [vmem:[#allocation9 + $0x24] sm:$0xff] %v436
    %445 = vst [vmem:[#allocation9 + $0x2c] sm:$0xf] %v437
    // Predicated region
    $region38: #{tpu_custom_call.1} parent=1 // pred_check
      _
    $region39: #{tpu_custom_call.1} parent=1 // pred_check_branch
      %447 = sbr.rel (0) target = $region41
    $region40: #{tpu_custom_call.1} parent=1 // pred_region
      %449 = vsyncadd [#allocation5], 0
      %s450 = sshll.u32 [#allocation9], 4
      %s451 = int_to_ptr.vmem [resolvable:$true] %s450
      %s452 = sshll.u32 %s5, 4
      %s453 = int_to_ptr.hbm [resolvable:$true] %s452
      %458 = dma.vmem_to_hbm [thread:$0]  %s451, 768, %s453, [#allocation5], 192, 192, 12
    $region41: #{tpu_custom_call.1} parent=1 // pred_fallthru
      _
    // Predicated region
    $region42: #{tpu_custom_call.1} parent=1 // pred_check
      _
    $region43: #{tpu_custom_call.1} parent=1 // pred_check_branch
      %460 = sbr.rel (0) target = $region45
    $region44: #{tpu_custom_call.1} parent=1 // pred_region
      %462 = dma.done [#allocation5], 768
    $region45: #{tpu_custom_call.1} parent=1 // pred_fallthru
      _
    %463 = vsyncpa [#allocation4], 1
    %464 = vsyncpa [#allocation7], 1
    %465 = vsyncpa [#allocation5], 1

</llo_original>
